<compile_context>
chip_gen: v6e
topology: v6e:2x2x1
jax: 0.10.0
libtpu: 0.0.40
codegen_flags: <defaults>
</compile_context>

<pallas_src>
import functools

import jax
import jax.numpy as jnp
from jax.experimental import pallas as pl
from jax.experimental.pallas import tpu as pltpu


# --------------------------- generation heuristics ---------------------------

def _tpu_flavor():
    try:
        kind = jax.devices()[0].device_kind.lower()
    except Exception:
        return "unknown"
    if "v5 lite" in kind or "v5e" in kind or "v5lite" in kind:
        return "v5e"
    if "v6" in kind:
        return "v6e"
    if "v7" in kind:
        return "v7x"
    return "unknown"


def _vmem_limit(flavor):
    try:
        cap = int(pltpu.get_tpu_info().vmem_capacity_bytes)
    except Exception:
        cap = 128 * 1024 * 1024 if flavor in ("v5e", "v6e") else 64 * 1024 * 1024
    cap = max(cap, 64 * 1024 * 1024)
    # leave headroom for Mosaic-internal scratch
    return min(cap - 16 * 1024 * 1024, 112 * 1024 * 1024)


_SINGLE_BUFFER_BYTES = 2 * 1024 * 1024


def _const_spec(block_shape, nbytes):
    """BlockSpec for a grid-invariant (VMEM-resident) block.

    Large resident blocks (weights) are single-buffered: double-buffering a
    block whose index never changes only wastes VMEM (important on v7x).
    """
    zeros = (0,) * len(block_shape)
    index_map = lambda *_: zeros
    if nbytes >= _SINGLE_BUFFER_BYTES and hasattr(pl, "Buffered"):
        return pl.BlockSpec(block_shape, index_map, pipeline_mode=pl.Buffered(1))
    return pl.BlockSpec(block_shape, index_map)


# ------------------------------- kernels -------------------------------------

def ln_qkv_kernel(x_ref, g_ref, b_ref, w_ref, bias_ref, o_ref):
    # x_ref: (TM, D) f32; g/b: (1, D); w_ref: (D, 3D) bf16; bias: (1, 3D)
    x = x_ref[...].astype(jnp.float32)
    mean = jnp.mean(x, axis=-1, keepdims=True)
    var = jnp.mean(jnp.square(x - mean), axis=-1, keepdims=True)
    xn = (x - mean) * jax.lax.rsqrt(var + 1e-5)
    xn = xn * g_ref[...].astype(jnp.float32) + b_ref[...].astype(jnp.float32)
    y = jnp.dot(xn.astype(jnp.bfloat16), w_ref[...],
                preferred_element_type=jnp.float32)
    y = y + bias_ref[...].astype(jnp.float32)
    o_ref[...] = y.astype(o_ref.dtype)


def attn_outproj_kernel(q_ref, k_ref, v_ref, wout_ref, bout_ref, res_ref, o_ref,
                        *, n_head, d_head, scale, softmax_dtype):
    # q_ref  : (TL, D) bf16  query rows for this (batch, l-tile) grid step
    # k_ref  : (L, D)  bf16  keys   for this batch element (resident across l)
    # v_ref  : (L, D)  bf16  values for this batch element (resident across l)
    # wout_ref: (D, D) bf16 ; bout_ref: (1, D) f32
    # res_ref / o_ref: (TL, D) f32 residual rows / output rows
    acc = res_ref[...].astype(jnp.float32) + bout_ref[...].astype(jnp.float32)
    # NOTE: the head loop is a static Python loop so q/k/v/w_out slices stay
    # static lane/sublane slices; the `acc` chain bounds live values per head.
    for h in range(n_head):
        lo, hi = h * d_head, (h + 1) * d_head
        # fold the softmax scale into q: L*dh muls instead of L*L
        q = (q_ref[:, lo:hi].astype(jnp.float32) * scale).astype(jnp.bfloat16)
        k = k_ref[:, lo:hi]
        v = v_ref[:, lo:hi]
        # scores: contract last dim of both operands (no k.T materialized)
        s = jax.lax.dot_general(q, k, (((1,), (1,)), ((), ())),
                                preferred_element_type=jnp.float32)   # (TL, L)
        s = s - jnp.max(s, axis=-1, keepdims=True)
        p = jnp.exp(s.astype(softmax_dtype))          # bf16 exp on v6e/v7x
        inv = pl.reciprocal(
            jnp.sum(p.astype(jnp.float32), axis=-1, keepdims=True), approx=True)
        p = (p * inv.astype(softmax_dtype)).astype(jnp.bfloat16)
        o_h = jnp.dot(p, v, preferred_element_type=jnp.float32)       # (TL, dh)
        # fused out_proj: head h only touches rows [lo, hi) of w_out, so the
        # concatenated head output never needs to be materialized / stored.
        acc = acc + jnp.dot(o_h.astype(jnp.bfloat16), wout_ref[lo:hi, :],
                            preferred_element_type=jnp.float32)
    o_ref[...] = acc.astype(o_ref.dtype)              # one lane-dense store


def mlp_block_kernel(x_ref, g_ref, b_ref, wfc_ref, bfc_ref, wproj_ref, bproj_ref,
                     o_ref):
    # Fused ln_2 + c_fc + QuickGELU + c_proj + residual. The (TM, 4D) hidden
    # activation never leaves VMEM.
    x = x_ref[...].astype(jnp.float32)                # also the residual
    mean = jnp.mean(x, axis=-1, keepdims=True)
    var = jnp.mean(jnp.square(x - mean), axis=-1, keepdims=True)
    xn = (x - mean) * jax.lax.rsqrt(var + 1e-5)
    xn = xn * g_ref[...].astype(jnp.float32) + b_ref[...].astype(jnp.float32)
    h = jnp.dot(xn.astype(jnp.bfloat16), wfc_ref[...],
                preferred_element_type=jnp.float32)
    h = h + bfc_ref[...].astype(jnp.float32)
    h = h * jax.nn.sigmoid(1.702 * h)                 # QuickGELU (f32, EUP)
    y = jnp.dot(h.astype(jnp.bfloat16), wproj_ref[...],
                preferred_element_type=jnp.float32)
    y = y + bproj_ref[...].astype(jnp.float32) + x    # residual fused
    o_ref[...] = y.astype(o_ref.dtype)


# ------------------------------- wrappers -------------------------------------

def pallas_ln_qkv(x2d, gamma, beta, w, bias, *, tile_m, vmem_limit):
    M, D = x2d.shape
    Dout = w.shape[1]
    tm = min(tile_m, M)
    return pl.pallas_call(
        ln_qkv_kernel,
        out_shape=jax.ShapeDtypeStruct((M, Dout), jnp.bfloat16),
        grid=(pl.cdiv(M, tm),),
        in_specs=[
            pl.BlockSpec((tm, D), lambda i: (i, 0)),
            _const_spec((1, D), 4 * D),
            _const_spec((1, D), 4 * D),
            _const_spec((D, Dout), 2 * D * Dout),      # bf16 weight, resident
            _const_spec((1, Dout), 4 * Dout),
        ],
        out_specs=pl.BlockSpec((tm, Dout), lambda i: (i, 0)),
        compiler_params=pltpu.CompilerParams(
            dimension_semantics=("parallel",), vmem_limit_bytes=vmem_limit),
    )(x2d, gamma.reshape(1, D), beta.reshape(1, D),
      w.astype(jnp.bfloat16), bias.reshape(1, Dout))


def pallas_attention_outproj(qkv_l, x_l, w_out, b_out, *, L, N, D, n_head,
                             tile_l, softmax_dtype, vmem_limit):
    """qkv_l: (L, N*3D) bf16 (q|k|v column blocks per batch element),
    x_l: (L, N*D) f32 residual. Returns x + out_proj(attn) as (L, N*D) f32."""
    dh = D // n_head
    tl = tile_l if (tile_l <= L and L % tile_l == 0) else L
    kernel = functools.partial(attn_outproj_kernel, n_head=n_head, d_head=dh,
                               scale=float(dh) ** -0.5,
                               softmax_dtype=softmax_dtype)
    return pl.pallas_call(
        kernel,
        out_shape=jax.ShapeDtypeStruct((L, N * D), x_l.dtype),
        grid=(N, L // tl),
        in_specs=[
            # q rows for this l-tile (column block 3n of width D)
            pl.BlockSpec((tl, D), lambda n, l: (l, 3 * n)),
            # K / V for this batch element -- constant across l => stay resident
            pl.BlockSpec((L, D), lambda n, l: (0, 3 * n + 1)),
            pl.BlockSpec((L, D), lambda n, l: (0, 3 * n + 2)),
            _const_spec((D, D), 2 * D * D),            # w_out bf16, resident
            _const_spec((1, D), 4 * D),                # b_out
            pl.BlockSpec((tl, D), lambda n, l: (l, n)),  # residual rows
        ],
        out_specs=pl.BlockSpec((tl, D), lambda n, l: (l, n)),
        compiler_params=pltpu.CompilerParams(
            dimension_semantics=("parallel", "parallel"),
            vmem_limit_bytes=vmem_limit),
    )(qkv_l, qkv_l, qkv_l, w_out.astype(jnp.bfloat16), b_out.reshape(1, D), x_l)


def pallas_mlp_block(x2d, gamma, beta, w_fc, b_fc, w_proj, b_proj, *, tile_m,
                     vmem_limit):
    M, D = x2d.shape
    Dh = w_fc.shape[1]
    tm = min(tile_m, M)
    return pl.pallas_call(
        mlp_block_kernel,
        out_shape=jax.ShapeDtypeStruct((M, D), x2d.dtype),
        grid=(pl.cdiv(M, tm),),
        in_specs=[
            pl.BlockSpec((tm, D), lambda i: (i, 0)),
            _const_spec((1, D), 4 * D),
            _const_spec((1, D), 4 * D),
            _const_spec((D, Dh), 2 * D * Dh),          # c_fc weight, resident
            _const_spec((1, Dh), 4 * Dh),
            _const_spec((Dh, D), 2 * Dh * D),          # c_proj weight, resident
            _const_spec((1, D), 4 * D),
        ],
        out_specs=pl.BlockSpec((tm, D), lambda i: (i, 0)),
        compiler_params=pltpu.CompilerParams(
            dimension_semantics=("parallel",), vmem_limit_bytes=vmem_limit),
    )(x2d, gamma.reshape(1, D), beta.reshape(1, D),
      w_fc.astype(jnp.bfloat16), b_fc.reshape(1, Dh),
      w_proj.astype(jnp.bfloat16), b_proj.reshape(1, D))


def residual_attention_block(x, params, *, tile_m=None, tile_l=256):
    """x: (L, N, D) float32. Mirrors the PyTorch module's forward.

    Requires D % 128 == 0 (true for CLIP: 512 / 768 / 1024 / 1280) so that all
    kernel blocks are lane-dense.
    """
    L, N, D = x.shape
    H = params["n_head"]
    assert D % H == 0 and D % 128 == 0

    flavor = _tpu_flavor()
    vmem_limit = _vmem_limit(flavor)
    if tile_m is None:
        tile_m = 512 if flavor in ("v5e", "v6e") else 256
    softmax_dtype = jnp.bfloat16 if flavor in ("v6e", "v7x") else jnp.float32

    # ---- attention branch: x + out_proj(attn(ln_1(x))) ----
    x2d = x.reshape(L * N, D)                                    # f32 residual
    qkv = pallas_ln_qkv(x2d, params["ln1_g"], params["ln1_b"],
                        params["w_in"], params["b_in"],
                        tile_m=tile_m, vmem_limit=vmem_limit)    # (L*N, 3D) bf16
    qkv_l = qkv.reshape(L, N * 3 * D)                            # metadata only
    x_l = x.reshape(L, N * D)                                    # metadata only
    x2 = pallas_attention_outproj(qkv_l, x_l, params["w_out"], params["b_out"],
                                  L=L, N=N, D=D, n_head=H, tile_l=tile_l,
                                  softmax_dtype=softmax_dtype,
                                  vmem_limit=vmem_limit)         # (L, N*D) f32

    # ---- MLP branch: x + c_proj(quick_gelu(c_fc(ln_2(x)))) ----
    out = pallas_mlp_block(x2.reshape(L * N, D),
                           params["ln2_g"], params["ln2_b"],
                           params["w_fc"], params["b_fc"],
                           params["w_proj"], params["b_proj"],
                           tile_m=tile_m, vmem_limit=vmem_limit)
    return out.reshape(L, N, D)


# ----------------------------- pure-JAX reference ----------------------------

def reference_block(x, params):
    L, N, D = x.shape
    H = params["n_head"]
    dh = D // H
    scale = float(dh) ** -0.5

    def ln(v, g, b):
        m = v.mean(-1, keepdims=True)
        var = ((v - m) ** 2).mean(-1, keepdims=True)
        return (v - m) / jnp.sqrt(var + 1e-5) * g + b

    x2d = x.reshape(L * N, D)
    h = ln(x2d, params["ln1_g"], params["ln1_b"])
    qkv = h @ params["w_in"] + params["b_in"]
    qkv = qkv.reshape(L, N, 3, H, dh)
    q = qkv[:, :, 0].transpose(1, 2, 0, 3).reshape(N * H, L, dh)
    k = qkv[:, :, 1].transpose(1, 2, 0, 3).reshape(N * H, L, dh)
    v = qkv[:, :, 2].transpose(1, 2, 0, 3).reshape(N * H, L, dh)
    s = jnp.einsum("bld,bmd->blm", q * scale, k)
    p = jax.nn.softmax(s, axis=-1)
    a = jnp.einsum("blm,bmd->bld", p, v)
    a = a.reshape(N, H, L, dh).transpose(2, 0, 1, 3).reshape(L * N, D)
    a = a @ params["w_out"] + params["b_out"]
    x2d = x2d + a

    h = ln(x2d, params["ln2_g"], params["ln2_b"])
    h = h @ params["w_fc"] + params["b_fc"]
    h = h * jax.nn.sigmoid(1.702 * h)
    h = h @ params["w_proj"] + params["b_proj"]
    x2d = x2d + h
    return x2d.reshape(L, N, D)


# ---------------------------------- main --------------------------------------

if __name__ == "__main__":
    L, N, D, H = 8, 2, 128, 4          # seq, batch, d_model (lane-dense), heads
    key = jax.random.PRNGKey(0)
    ks = jax.random.split(key, 8)

    def nrm(k, shape, s=0.02):
        return (s * jax.random.normal(k, shape)).astype(jnp.float32)

    params = {
        "n_head": H,
        "ln1_g": jnp.ones((D,), jnp.float32),
        "ln1_b": jnp.zeros((D,), jnp.float32),
        "ln2_g": jnp.ones((D,), jnp.float32),
        "ln2_b": jnp.zeros((D,), jnp.float32),
        # in_proj_weight is (3D, D) in torch; stored transposed (D, 3D)
        "w_in": nrm(ks[0], (D, 3 * D)),
        "b_in": nrm(ks[1], (3 * D,)),
        # out_proj: (D, D) transposed
        "w_out": nrm(ks[2], (D, D)),
        "b_out": nrm(ks[3], (D,)),
        # mlp c_fc: (D, 4D) transposed; c_proj: (4D, D) transposed
        "w_fc": nrm(ks[4], (D, 4 * D)),
        "b_fc": nrm(ks[5], (4 * D,)),
        "w_proj": nrm(ks[6], (4 * D, D)),
        "b_proj": nrm(ks[7], (D,)),
    }

    x = jax.random.normal(jax.random.PRNGKey(42), (L, N, D), dtype=jnp.float32)

    out = residual_attention_block(x, params)
    out = jax.block_until_ready(out)

    ref = reference_block(x, params)
    assert out.shape == (L, N, D) and out.dtype == jnp.float32
    # matmuls use bf16 operands (f32 accumulation) and, on v6e/v7x, bf16
    # softmax exp -> relaxed tolerance vs the f32 reference
    assert jnp.allclose(out, ref, atol=3e-3, rtol=3e-3), "mismatch vs reference"

    print("KERNEL_OK")
</pallas_src>

<mosaic_0001>
module attributes {stable_mosaic.version = 11 : i64} {
  func.func @ln_qkv_kernel(%arg0: i32, %arg1: memref<16x128xf32, #tpu.memory_space<vmem>>, %arg2: memref<1x128xf32, #tpu.memory_space<vmem>>, %arg3: memref<1x128xf32, #tpu.memory_space<vmem>>, %arg4: memref<128x384xbf16, #tpu.memory_space<vmem>>, %arg5: memref<1x384xf32, #tpu.memory_space<vmem>>, %arg6: memref<16x384xbf16, #tpu.memory_space<vmem>>) attributes {dimension_semantics = [#tpu.dimension_semantics<parallel>], iteration_bounds = array<i64: 1>, scalar_prefetch = 0 : i64, scratch_operands = 0 : i64, tpu.core_type = #tpu.core_type<tc>, window_params = [{transform_indices = @transform_0, window_bounds = array<i64: 16, 128>}, {pipeline_mode = #tpu.pipeline_mode<synchronous>, transform_indices = @transform_1, window_bounds = array<i64: 1, 128>}, {pipeline_mode = #tpu.pipeline_mode<synchronous>, transform_indices = @transform_2, window_bounds = array<i64: 1, 128>}, {pipeline_mode = #tpu.pipeline_mode<synchronous>, transform_indices = @transform_3, window_bounds = array<i64: 128, 384>}, {pipeline_mode = #tpu.pipeline_mode<synchronous>, transform_indices = @transform_4, window_bounds = array<i64: 1, 384>}, {transform_indices = @transform_5, window_bounds = array<i64: 16, 384>}]} {
    %c0 = arith.constant 0 : index
    %c0_0 = arith.constant 0 : index
    %0 = vector.load %arg1[%c0, %c0_0] : memref<16x128xf32, #tpu.memory_space<vmem>>, vector<16x128xf32>
    %cst = arith.constant dense<0.000000e+00> : vector<16xf32>
    %1 = vector.multi_reduction <add>, %0, %cst [1] : vector<16x128xf32> to vector<16xf32>
    %2 = vector.shape_cast %1 : vector<16xf32> to vector<16x1xf32>
    %cst_1 = arith.constant 1.280000e+02 : f32
    %3 = vector.broadcast %cst_1 : f32 to vector<16x1xf32>
    %4 = arith.divf %2, %3 : vector<16x1xf32>
    %5 = vector.broadcast %4 : vector<16x1xf32> to vector<16x128xf32>
    %6 = arith.subf %0, %5 : vector<16x128xf32>
    %7 = arith.mulf %6, %6 : vector<16x128xf32>
    %cst_2 = arith.constant dense<0.000000e+00> : vector<16xf32>
    %8 = vector.multi_reduction <add>, %7, %cst_2 [1] : vector<16x128xf32> to vector<16xf32>
    %9 = vector.shape_cast %8 : vector<16xf32> to vector<16x1xf32>
    %cst_3 = arith.constant 1.280000e+02 : f32
    %10 = vector.broadcast %cst_3 : f32 to vector<16x1xf32>
    %11 = arith.divf %9, %10 : vector<16x1xf32>
    %12 = vector.broadcast %4 : vector<16x1xf32> to vector<16x128xf32>
    %13 = arith.subf %0, %12 : vector<16x128xf32>
    %cst_4 = arith.constant 9.99999974E-6 : f32
    %14 = vector.broadcast %cst_4 : f32 to vector<16x1xf32>
    %15 = arith.addf %11, %14 : vector<16x1xf32>
    %16 = math.rsqrt %15 : vector<16x1xf32>
    %17 = vector.broadcast %16 : vector<16x1xf32> to vector<16x128xf32>
    %18 = arith.mulf %13, %17 : vector<16x128xf32>
    %c0_5 = arith.constant 0 : index
    %c0_6 = arith.constant 0 : index
    %19 = vector.load %arg2[%c0_5, %c0_6] : memref<1x128xf32, #tpu.memory_space<vmem>>, vector<1x128xf32>
    %20 = vector.broadcast %19 : vector<1x128xf32> to vector<16x128xf32>
    %21 = arith.mulf %18, %20 : vector<16x128xf32>
    %c0_7 = arith.constant 0 : index
    %c0_8 = arith.constant 0 : index
    %22 = vector.load %arg3[%c0_7, %c0_8] : memref<1x128xf32, #tpu.memory_space<vmem>>, vector<1x128xf32>
    %23 = vector.broadcast %22 : vector<1x128xf32> to vector<16x128xf32>
    %24 = arith.addf %21, %23 : vector<16x128xf32>
    %25 = arith.truncf %24 : vector<16x128xf32> to vector<16x128xbf16>
    %c0_9 = arith.constant 0 : index
    %c0_10 = arith.constant 0 : index
    %26 = vector.load %arg4[%c0_9, %c0_10] : memref<128x384xbf16, #tpu.memory_space<vmem>>, vector<128x384xbf16>
    %cst_11 = arith.constant dense<0.000000e+00> : vector<16x384xf32>
    %27 = tpu.matmul %25, %26, %cst_11 {dimension_numbers = #tpu.dot_dimension_numbers<[1], [0], [0], [1], [0, 0, 1, 1], [], []>} : vector<16x128xbf16>, vector<128x384xbf16>, vector<16x384xf32> -> vector<16x384xf32>
    %c0_12 = arith.constant 0 : index
    %c0_13 = arith.constant 0 : index
    %28 = vector.load %arg5[%c0_12, %c0_13] : memref<1x384xf32, #tpu.memory_space<vmem>>, vector<1x384xf32>
    %29 = vector.broadcast %28 : vector<1x384xf32> to vector<16x384xf32>
    %30 = arith.addf %27, %29 : vector<16x384xf32>
    %31 = arith.truncf %30 : vector<16x384xf32> to vector<16x384xbf16>
    %c0_14 = arith.constant 0 : index
    %c0_15 = arith.constant 0 : index
    %32 = vector.load %arg6[%c0_14, %c0_15] : memref<16x384xbf16, #tpu.memory_space<vmem>>, vector<16x384xbf16>
    tpu.vector_store %arg6[%c0_14, %c0_15], %31 {strides = array<i32>} : memref<16x384xbf16, #tpu.memory_space<vmem>>, vector<16x384xbf16>,
    return
  }
  func.func @transform_0(%arg0: i32) -> (i32, i32) {
    %c0_i32 = arith.constant 0 : i32
    %c0_i32_0 = arith.constant 0 : i32
    return %arg0, %c0_i32 : i32, i32
  }
  func.func @transform_1(%arg0: i32) -> (i32, i32) {
    %c0_i32 = arith.constant 0 : i32
    %c0_i32_0 = arith.constant 0 : i32
    %c0_i32_1 = arith.constant 0 : i32
    return %c0_i32, %c0_i32_0 : i32, i32
  }
  func.func @transform_2(%arg0: i32) -> (i32, i32) {
    %c0_i32 = arith.constant 0 : i32
    %c0_i32_0 = arith.constant 0 : i32
    %c0_i32_1 = arith.constant 0 : i32
    return %c0_i32, %c0_i32_0 : i32, i32
  }
  func.func @transform_3(%arg0: i32) -> (i32, i32) {
    %c0_i32 = arith.constant 0 : i32
    %c0_i32_0 = arith.constant 0 : i32
    %c0_i32_1 = arith.constant 0 : i32
    return %c0_i32, %c0_i32_0 : i32, i32
  }
  func.func @transform_4(%arg0: i32) -> (i32, i32) {
    %c0_i32 = arith.constant 0 : i32
    %c0_i32_0 = arith.constant 0 : i32
    %c0_i32_1 = arith.constant 0 : i32
    return %c0_i32, %c0_i32_0 : i32, i32
  }
  func.func @transform_5(%arg0: i32) -> (i32, i32) {
    %c0_i32 = arith.constant 0 : i32
    %c0_i32_0 = arith.constant 0 : i32
    return %arg0, %c0_i32 : i32, i32
  }
}

</mosaic_0001>

<llo_original>
// kernel: tpu_custom_call.1
$region0: #{tpu_custom_call.1}
  #allocation0 [shape = 'u32[]', space=smem, size = 0x4, offset = 0x4, fixed_abs, tag = 'smem constant byte address 0x4 - core index']
  #allocation1 [shape = 'u32[144,128]{1,0:T(1,128)}', space=vmem, size = 0x12000, scoped, tag = 'internal scratch']
  %s0 = inlined_call_operand.hbm [shape: f32[16,128], index: 0, kind: input, shape index: {}]
  %s1 = inlined_call_operand.vmem [shape: f32[1,128], index: 1, kind: input, shape index: {}]
  %s2 = inlined_call_operand.vmem [shape: f32[1,128], index: 2, kind: input, shape index: {}]
  %s3 = inlined_call_operand.hbm [shape: bf16[128,384], index: 3, kind: input, shape index: {}]
  %s4 = inlined_call_operand.vmem [shape: f32[1,384], index: 4, kind: input, shape index: {}]
  %s5 = inlined_call_operand.hbm [shape: bf16[16,384], index: 5, kind: output, shape index: {}]
  %s6 = sld [smem:[#allocation0]]
  $region38: #{tpu_custom_call.1} parent=0
    _
  %s8 = ssub.s32 1, %s6
  %s9 = scalar_select 0, %s8, %s6
  $region1: #{tpu_custom_call.1} parent=0
    #allocation2 [shape = 'u8[8192]{0}', space=vmem, size = 0x2000, scoped, tag = 'input window, operand 0, single buffered']
    #allocation3 [shape = 's32[1]{0}', space=sflag, size = 0x4, scoped, tag = 'scoped memory for tpu_custom_call.1']
    #allocation4 [shape = 's32[1]{0}', space=sflag, size = 0x4, scoped, tag = 'scoped memory for tpu_custom_call.1']
    #allocation5 [shape = 'u8[98304]{0}', space=vmem, size = 0x18000, scoped, tag = 'input window, operand 3, single buffered']
    #allocation6 [shape = 's32[1]{0}', space=sflag, size = 0x4, scoped, tag = 'scoped memory for tpu_custom_call.1']
    #allocation7 [shape = 'u8[12288]{0}', space=vmem, size = 0x3000, scoped, tag = 'output window, operand 0, single buffered']
    %10 = vsyncpa [#allocation3], 0
    %11 = vsyncpa [#allocation6], 0
    %12 = vsyncpa [#allocation4], 0
    // Predicated region
    $region2: #{tpu_custom_call.1} parent=1 // pred_check
      _
    $region3: #{tpu_custom_call.1} parent=1 // pred_check_branch
      %14 = sbr.rel (0) target = $region5
    $region4: #{tpu_custom_call.1} parent=1 // pred_region
      %s16 = ssub.s32 256, 256
      %17 = vsyncadd [#allocation3], %s16
      %s18 = sshll.u32 [#allocation2], 4
      %s19 = int_to_ptr.vmem [resolvable:$true] %s18
      %24 = dma.hbm_to_vmem [thread:$0]  %s0, 256, %s19, [#allocation3], 128, 128, 8
    $region5: #{tpu_custom_call.1} parent=1 // pred_fallthru
      _
    // Predicated region
    $region6: #{tpu_custom_call.1} parent=1 // pred_check
      _
    $region7: #{tpu_custom_call.1} parent=1 // pred_check_branch
      %26 = sbr.rel (0) target = $region9
    $region8: #{tpu_custom_call.1} parent=1 // pred_region
      _
    $region9: #{tpu_custom_call.1} parent=1 // pred_fallthru
      _
    // Predicated region
    $region10: #{tpu_custom_call.1} parent=1 // pred_check
      _
    $region11: #{tpu_custom_call.1} parent=1 // pred_check_branch
      %28 = sbr.rel (0) target = $region13
    $region12: #{tpu_custom_call.1} parent=1 // pred_region
      _
    $region13: #{tpu_custom_call.1} parent=1 // pred_fallthru
      _
    // Predicated region
    $region14: #{tpu_custom_call.1} parent=1 // pred_check
      _
    $region15: #{tpu_custom_call.1} parent=1 // pred_check_branch
      %30 = sbr.rel (0) target = $region17
    $region16: #{tpu_custom_call.1} parent=1 // pred_region
      %s32 = ssub.s32 3072, 3072
      %33 = vsyncadd [#allocation6], %s32
      %s34 = sshll.u32 [#allocation5], 4
      %s35 = int_to_ptr.vmem [resolvable:$true] %s34
      %40 = dma.hbm_to_vmem [thread:$0]  %s3, 3072, %s35, [#allocation6], 192, 192, 12
    $region17: #{tpu_custom_call.1} parent=1 // pred_fallthru
      _
    // Predicated region
    $region18: #{tpu_custom_call.1} parent=1 // pred_check
      _
    $region19: #{tpu_custom_call.1} parent=1 // pred_check_branch
      %42 = sbr.rel (0) target = $region21
    $region20: #{tpu_custom_call.1} parent=1 // pred_region
      _
    $region21: #{tpu_custom_call.1} parent=1 // pred_fallthru
      _
    // Predicated region
    $region22: #{tpu_custom_call.1} parent=1 // pred_check
      _
    $region23: #{tpu_custom_call.1} parent=1 // pred_check_branch
      %44 = sbr.rel (0) target = $region25
    $region24: #{tpu_custom_call.1} parent=1 // pred_region
      %45 = dma.done [#allocation3], 256
    $region25: #{tpu_custom_call.1} parent=1 // pred_fallthru
      _
    // Predicated region
    $region26: #{tpu_custom_call.1} parent=1 // pred_check
      _
    $region27: #{tpu_custom_call.1} parent=1 // pred_check_branch
      %47 = sbr.rel (0) target = $region29
    $region28: #{tpu_custom_call.1} parent=1 // pred_region
      %48 = dma.done [#allocation6], 3072
    $region29: #{tpu_custom_call.1} parent=1 // pred_fallthru
      _
    %v50 = vld [vmem:[#allocation2] sm:$0xff]
    %v51 = vld [vmem:[#allocation2 + $0x8] sm:$0xff]
    %52 = vadd.xlane.f32.xlu0 %v50
    %v53 = vpop.xlane.xlu0 %52
    %54 = vadd.xlane.f32.xlu0 %v51
    %v55 = vpop.xlane.xlu0 %54
    %v56 = vrcp.pop 128.0
    %v57 = vmul.f32 %v53, %v56
    %v58 = vmul.f32 %v55, %v56
    %v59 = vsub.f32 %v50, %v57
    %v60 = vsub.f32 %v51, %v58
    %v61 = vmul.f32 %v59, %v59
    %v62 = vmul.f32 %v60, %v60
    %63 = vadd.xlane.f32.xlu0 %v61
    %v64 = vpop.xlane.xlu0 %63
    %65 = vadd.xlane.f32.xlu0 %v62
    %v66 = vpop.xlane.xlu0 %65
    %v67 = vmul.f32 %v64, %v56
    %v68 = vmul.f32 %v66, %v56
    %v69 = vadd.f32 %v67, 1e-05
    %v70 = vadd.f32 %v68, 1e-05
    %v71 = vrsqrt.pop %v69
    %v72 = vrsqrt.pop %v70
    %v73 = vmul.f32 %v59, %v71
    %v74 = vmul.f32 %v60, %v72
    %v75 = vld [vmem:[%s1] sm:$0x1]
    %v77 = vlaneseq
    %v78 = vshrl.u32 %v77, 7
    %v79 = vsub.s32 0, %v78
    %v80 = vrot.slane %v75, %v79
    %v82 = vmul.f32 %v73, %v80
    %v83 = vmul.f32 %v74, %v80
    %v84 = vld [vmem:[%s2] sm:$0x1]
    %v86 = vlaneseq
    %v87 = vshrl.u32 %v86, 7
    %v88 = vsub.s32 0, %v87
    %v89 = vrot.slane %v84, %v88
    %v91 = vadd.f32 %v82, %v89
    %v92 = vadd.f32 %v83, %v89
    %v93 = vpack.c.bf16 %v92, %v91
    %v94 = vld [vmem:[#allocation5] sm:$0xff]
    %v95 = vld [vmem:[#allocation5 + $0x8] sm:$0xf]
    %v96 = vld [vmem:[#allocation5 + $0xc] sm:$0xff]
    %v97 = vld [vmem:[#allocation5 + $0x14] sm:$0xf]
    %v98 = vld [vmem:[#allocation5 + $0x18] sm:$0xff]
    %v99 = vld [vmem:[#allocation5 + $0x20] sm:$0xf]
    %v100 = vld [vmem:[#allocation5 + $0x24] sm:$0xff]
    %v101 = vld [vmem:[#allocation5 + $0x2c] sm:$0xf]
    %v102 = vld [vmem:[#allocation5 + $0x30] sm:$0xff]
    %v103 = vld [vmem:[#allocation5 + $0x38] sm:$0xf]
    %v104 = vld [vmem:[#allocation5 + $0x3c] sm:$0xff]
    %v105 = vld [vmem:[#allocation5 + $0x44] sm:$0xf]
    %v106 = vld [vmem:[#allocation5 + $0x48] sm:$0xff]
    %v107 = vld [vmem:[#allocation5 + $0x50] sm:$0xf]
    %v108 = vld [vmem:[#allocation5 + $0x54] sm:$0xff]
    %v109 = vld [vmem:[#allocation5 + $0x5c] sm:$0xf]
    %v110 = vld [vmem:[#allocation5 + $0x60] sm:$0xff]
    %v111 = vld [vmem:[#allocation5 + $0x68] sm:$0xf]
    %v112 = vld [vmem:[#allocation5 + $0x6c] sm:$0xff]
    %v113 = vld [vmem:[#allocation5 + $0x74] sm:$0xf]
    %v114 = vld [vmem:[#allocation5 + $0x78] sm:$0xff]
    %v115 = vld [vmem:[#allocation5 + $0x80] sm:$0xf]
    %v116 = vld [vmem:[#allocation5 + $0x84] sm:$0xff]
    %v117 = vld [vmem:[#allocation5 + $0x8c] sm:$0xf]
    %v118 = vld [vmem:[#allocation5 + $0x90] sm:$0xff]
    %v119 = vld [vmem:[#allocation5 + $0x98] sm:$0xf]
    %v120 = vld [vmem:[#allocation5 + $0x9c] sm:$0xff]
    %v121 = vld [vmem:[#allocation5 + $0xa4] sm:$0xf]
    %v122 = vld [vmem:[#allocation5 + $0xa8] sm:$0xff]
    %v123 = vld [vmem:[#allocation5 + $0xb0] sm:$0xf]
    %v124 = vld [vmem:[#allocation5 + $0xb4] sm:$0xff]
    %v125 = vld [vmem:[#allocation5 + $0xbc] sm:$0xf]
    %v126 = vld [vmem:[%s4] sm:$0x7]
    %v128 = vlaneseq
    %v129 = vshrl.u32 %v128, 7
    %v130 = vsub.s32 0, %v129
    %v131 = vrot.slane %v126, %v130
    %v132 = vlaneseq
    %v133 = vshrl.u32 %v132, 7
    %v134 = vsub.s32 1, %v133
    %v135 = vrot.slane %v126, %v134
    %v136 = vlaneseq
    %v137 = vshrl.u32 %v136, 7
    %v138 = vsub.s32 2, %v137
    %v139 = vrot.slane %v126, %v138
    %v175 = vunpack.c.l.b16 %v94
    %v176 = vunpack.c.h.b16 %v94
    %v177 = vunpack.c.l.b16 %v95
    %v178 = vunpack.c.l.b16 %v96
    %v179 = vunpack.c.h.b16 %v96
    %v180 = vunpack.c.l.b16 %v97
    %v181 = vunpack.c.l.b16 %v98
    %v182 = vunpack.c.h.b16 %v98
    %v183 = vunpack.c.l.b16 %v99
    %v184 = vunpack.c.l.b16 %v100
    %v185 = vunpack.c.h.b16 %v100
    %v186 = vunpack.c.l.b16 %v101
    %v187 = vunpack.c.l.b16 %v102
    %v188 = vunpack.c.h.b16 %v102
    %v189 = vunpack.c.l.b16 %v103
    %v190 = vunpack.c.l.b16 %v104
    %v191 = vunpack.c.h.b16 %v104
    %v192 = vunpack.c.l.b16 %v105
    %v193 = vunpack.c.l.b16 %v106
    %v194 = vunpack.c.h.b16 %v106
    %v195 = vunpack.c.l.b16 %v107
    %v196 = vunpack.c.l.b16 %v108
    %v197 = vunpack.c.h.b16 %v108
    %v198 = vunpack.c.l.b16 %v109
    %v199 = vunpack.c.l.b16 %v110
    %v200 = vunpack.c.h.b16 %v110
    %v201 = vunpack.c.l.b16 %v111
    %v202 = vunpack.c.l.b16 %v112
    %v203 = vunpack.c.h.b16 %v112
    %v204 = vunpack.c.l.b16 %v113
    %v205 = vunpack.c.l.b16 %v114
    %v206 = vunpack.c.h.b16 %v114
    %v207 = vunpack.c.l.b16 %v115
    %v208 = vunpack.c.l.b16 %v116
    %v209 = vunpack.c.h.b16 %v116
    %v210 = vunpack.c.l.b16 %v117
    %v211 = vunpack.c.l.b16 %v118
    %v212 = vunpack.c.h.b16 %v118
    %v213 = vunpack.c.l.b16 %v119
    %v214 = vunpack.c.l.b16 %v120
    %v215 = vunpack.c.h.b16 %v120
    %v216 = vunpack.c.l.b16 %v121
    %v217 = vunpack.c.l.b16 %v122
    %v218 = vunpack.c.h.b16 %v122
    %v219 = vunpack.c.l.b16 %v123
    %v220 = vunpack.c.l.b16 %v124
    %v221 = vunpack.c.h.b16 %v124
    %v222 = vunpack.c.l.b16 %v125
    %v223 = vpack.c.b16 %v178, %v175
    %v224 = vpack.c.b16 %v179, %v176
    %v225 = vpack.c.b16 %v180, %v177
    %v226 = vpack.c.b16 %v184, %v181
    %v227 = vpack.c.b16 %v185, %v182
    %v228 = vpack.c.b16 %v186, %v183
    %v229 = vpack.c.b16 %v190, %v187
    %v230 = vpack.c.b16 %v191, %v188
    %v231 = vpack.c.b16 %v192, %v189
    %v232 = vpack.c.b16 %v196, %v193
    %v233 = vpack.c.b16 %v197, %v194
    %v234 = vpack.c.b16 %v198, %v195
    %v235 = vpack.c.b16 %v202, %v199
    %v236 = vpack.c.b16 %v203, %v200
    %v237 = vpack.c.b16 %v204, %v201
    %v238 = vpack.c.b16 %v208, %v205
    %v239 = vpack.c.b16 %v209, %v206
    %v240 = vpack.c.b16 %v210, %v207
    %v241 = vpack.c.b16 %v214, %v211
    %v242 = vpack.c.b16 %v215, %v212
    %v243 = vpack.c.b16 %v216, %v213
    %v244 = vpack.c.b16 %v220, %v217
    %v245 = vpack.c.b16 %v221, %v218
    %v246 = vpack.c.b16 %v222, %v219
    %271 = vmatprep.subr.bf16.mxu0 %v245
    %272 = vmatpush1.bf16.msra.mxu0 %v244
    %273 = vmatprep.subr.bf16.mxu0 %v242
    %274 = vmatpush1.bf16.msra.mxu0 %v241
    %275 = vmatprep.subr.bf16.mxu0 %v239
    %276 = vmatpush1.bf16.msra.mxu0 %v238
    %277 = vmatprep.subr.bf16.mxu0 %v236
    %278 = vmatpush1.bf16.msra.mxu0 %v235
    %279 = vmatprep.subr.bf16.mxu0 %v233
    %280 = vmatpush1.bf16.msra.mxu0 %v232
    %281 = vmatprep.subr.bf16.mxu0 %v230
    %282 = vmatpush1.bf16.msra.mxu0 %v229
    %283 = vmatprep.subr.bf16.mxu0 %v227
    %284 = vmatpush1.bf16.msra.mxu0 %v226
    %285 = vmatprep.subr.bf16.mxu0 %v224
    %286 = vmatpush1.bf16.msra.mxu0 %v223
    %287 = vmatprep.subr.bf16.mxu0 0
    %288 = vmatpush2.bf16.msra.mxu0 0
    %289 = vmatprep.subr.bf16.mxu0 0
    %290 = vmatpush2.bf16.msra.mxu0 0
    %291 = vmatprep.subr.bf16.mxu0 0
    %292 = vmatpush2.bf16.msra.mxu0 0
    %293 = vmatprep.subr.bf16.mxu0 0
    %294 = vmatpush2.bf16.msra.mxu0 0
    %295 = vmatprep.subr.bf16.mxu0 0
    %296 = vmatpush2.bf16.msra.mxu0 0
    %297 = vmatprep.subr.bf16.mxu0 0
    %298 = vmatpush2.bf16.msra.mxu0 0
    %299 = vmatprep.subr.bf16.mxu0 0
    %300 = vmatpush2.bf16.msra.mxu0 0
    %301 = vmatprep.subr.bf16.mxu0 0
    %302 = vmatpush2.bf16.msra.mxu0 0
    %303 = vmatprep.mubr.bf16.mxu0 0
    %304 = vmatmul.mubr.bf16.gmra.mxu0 %v93
    %v305 = vpop.f32.mrf.mxu0
    %v306 = vadd.f32 %v131, %v305
    %v307 = vpop.f32.mrf.mxu0
    %v308 = vadd.f32 %v135, %v307
    %v309 = vpop.f32.mrf.mxu0
    %v310 = vadd.f32 %v131, %v309
    %v311 = vpop.f32.mrf.mxu0
    %v312 = vadd.f32 %v135, %v311
    %313 = vdwg.mxu0
    %314 = vmatprep.subr.bf16.mxu0 0
    %315 = vmatpush1.bf16.msra.mxu0 %v246
    %316 = vmatprep.subr.bf16.mxu0 0
    %317 = vmatpush1.bf16.msra.mxu0 %v243
    %318 = vmatprep.subr.bf16.mxu0 0
    %319 = vmatpush1.bf16.msra.mxu0 %v240
    %320 = vmatprep.subr.bf16.mxu0 0
    %321 = vmatpush1.bf16.msra.mxu0 %v237
    %322 = vmatprep.subr.bf16.mxu0 0
    %323 = vmatpush1.bf16.msra.mxu0 %v234
    %324 = vmatprep.subr.bf16.mxu0 0
    %325 = vmatpush1.bf16.msra.mxu0 %v231
    %326 = vmatprep.subr.bf16.mxu0 0
    %327 = vmatpush1.bf16.msra.mxu0 %v228
    %328 = vmatprep.subr.bf16.mxu0 0
    %329 = vmatpush1.bf16.msra.mxu0 %v225
    %330 = vmatprep.subr.bf16.mxu0 0
    %331 = vmatpush2.bf16.msra.mxu0 0
    %332 = vmatprep.subr.bf16.mxu0 0
    %333 = vmatpush2.bf16.msra.mxu0 0
    %334 = vmatprep.subr.bf16.mxu0 0
    %335 = vmatpush2.bf16.msra.mxu0 0
    %336 = vmatprep.subr.bf16.mxu0 0
    %337 = vmatpush2.bf16.msra.mxu0 0
    %338 = vmatprep.subr.bf16.mxu0 0
    %339 = vmatpush2.bf16.msra.mxu0 0
    %340 = vmatprep.subr.bf16.mxu0 0
    %341 = vmatpush2.bf16.msra.mxu0 0
    %342 = vmatprep.subr.bf16.mxu0 0
    %343 = vmatpush2.bf16.msra.mxu0 0
    %344 = vmatprep.subr.bf16.mxu0 0
    %345 = vmatpush2.bf16.msra.mxu0 0
    %346 = vmatprep.mubr.bf16.mxu0 0
    %347 = vmatmul.mubr.bf16.gmra.mxu0 %v93
    %v348 = vpop.f32.mrf.mxu0
    %v349 = vadd.f32 %v139, %v348
    %v350 = vpop.f32.mrf.mxu0
    %v351 = vpop.f32.mrf.mxu0
    %v352 = vadd.f32 %v139, %v351
    %v353 = vpop.f32.mrf.mxu0
    %354 = vdwg.mxu0
    %v355 = vpack.c.bf16 %v310, %v306
    %v356 = vpack.c.bf16 %v312, %v308
    %v357 = vpack.c.bf16 %v352, %v349
    %v361 = vunpack.c.l.b16 %v355
    %v362 = vunpack.c.l.b16 %v356
    %v363 = vunpack.c.l.b16 %v357
    %v364 = vunpack.c.h.b16 %v355
    %v365 = vunpack.c.h.b16 %v356
    %v366 = vunpack.c.h.b16 %v357
    %v367 = vpack.c.b16 %v362, %v361
    %v368 = vpack.c.b16 %v363, %v363
    %v369 = vpack.c.b16 %v365, %v364
    %v370 = vpack.c.b16 %v366, %v366
    %375 = vst [vmem:[#allocation7] sm:$0xff] %v367
    %376 = vst [vmem:[#allocation7 + $0x8] sm:$0xf] %v368
    %377 = vst [vmem:[#allocation7 + $0xc] sm:$0xff] %v369
    %378 = vst [vmem:[#allocation7 + $0x14] sm:$0xf] %v370
    // Predicated region
    $region30: #{tpu_custom_call.1} parent=1 // pred_check
      _
    $region31: #{tpu_custom_call.1} parent=1 // pred_check_branch
      %380 = sbr.rel (0) target = $region33
    $region32: #{tpu_custom_call.1} parent=1 // pred_region
      %s382 = ssub.s32 384, 384
      %383 = vsyncadd [#allocation4], %s382
      %s384 = sshll.u32 [#allocation7], 4
      %s385 = int_to_ptr.vmem [resolvable:$true] %s384
      %390 = dma.vmem_to_hbm [thread:$0]  %s385, 384, %s5, [#allocation4], 192, 192, 12
    $region33: #{tpu_custom_call.1} parent=1 // pred_fallthru
      _
    // Predicated region
    $region34: #{tpu_custom_call.1} parent=1 // pred_check
      _
    $region35: #{tpu_custom_call.1} parent=1 // pred_check_branch
      %392 = sbr.rel (0) target = $region37
    $region36: #{tpu_custom_call.1} parent=1 // pred_region
      %393 = dma.done [#allocation4], 384
    $region37: #{tpu_custom_call.1} parent=1 // pred_fallthru
      _
    %394 = vsyncpa [#allocation3], 1
    %395 = vsyncpa [#allocation6], 1
    %396 = vsyncpa [#allocation4], 1

</llo_original>
